<compile_context>
chip_gen: v7x
topology: tpu7x:2x2x1
jax: 0.10.0
libtpu: 0.0.40
codegen_flags: <defaults>
</compile_context>

<pallas_src>
import jax
import jax.numpy as jnp
from jax.experimental import pallas as pl
from jax.experimental.pallas import tpu as pltpu

NUM_CORES = 2  # megacore split of the row stream (harmless extra outer step on 1-TC chips)


def _span_loss_kernel(mask_ref, spos_ref, epos_ref, slog_ref, elog_ref,
                      out_ref, acc_s_ref, acc_e_ref, acc_c_ref):
    t = pl.program_id(1)

    @pl.when(t == 0)
    def _init():
        acc_s_ref[...] = jnp.zeros_like(acc_s_ref)
        acc_e_ref[...] = jnp.zeros_like(acc_e_ref)
        acc_c_ref[...] = jnp.zeros_like(acc_c_ref)

    slog = slog_ref[...].astype(jnp.float32)      # (TILE_N, L) cast in-kernel
    elog = elog_ref[...].astype(jnp.float32)      # (TILE_N, L)
    spos = spos_ref[...]                          # (TILE_N, 1) int32
    epos = epos_ref[...]                          # (TILE_N, 1) int32
    m = (mask_ref[...] == 1).astype(jnp.float32)  # (TILE_N, 1)

    tn, nl = slog.shape
    lane = jax.lax.broadcasted_iota(jnp.int32, (tn, nl), 1)

    def nll(logits, labels):
        # mx + log(sum(exp(x - mx))) - x[label]; "picked" reduces raw logits so it
        # does not depend on the max reduction and no shifted temp stays live.
        mx = jnp.max(logits, axis=-1, keepdims=True)
        sumexp = jnp.sum(jnp.exp(logits - mx), axis=-1, keepdims=True)
        picked = jnp.sum(jnp.where(lane == labels, logits, 0.0),
                         axis=-1, keepdims=True)
        return mx + jnp.log(sumexp) - picked      # (TILE_N, 1)

    acc_s_ref[...] += nll(slog, spos) * m
    acc_e_ref[...] += nll(elog, epos) * m
    acc_c_ref[...] += m

    @pl.when(t == pl.num_programs(1) - 1)
    def _finalize():
        s_sum = jnp.sum(acc_s_ref[...])
        e_sum = jnp.sum(acc_e_ref[...])
        cnt = jnp.sum(acc_c_ref[...])
        sub = jax.lax.broadcasted_iota(jnp.int32, out_ref.shape, 0)
        lan = jax.lax.broadcasted_iota(jnp.int32, out_ref.shape, 1)
        row0 = sub == 0
        out_ref[...] = jnp.where(row0 & (lan == 0), s_sum,
                       jnp.where(row0 & (lan == 1), e_sum,
                       jnp.where(row0 & (lan == 2), cnt, 0.0)))


def _round_up(x, m):
    return (x + m - 1) // m * m


def span_loss(attention_mask, start_logits, end_logits,
              start_positions, end_positions):
    """JAX/Pallas equivalent of SpanLoss.forward -> (total, start, end)."""
    B, S, L = start_logits.shape
    N = B * S
    itemsize = jnp.dtype(start_logits.dtype).itemsize

    # ---- tile sizing: ~2 MiB of logits per input per tile, rows multiple of 8
    target_bytes = 2 << 20
    tile_n = max(8, min(1024, target_bytes // max(1, L * itemsize)))
    tile_n = max(8, (int(tile_n) // 8) * 8)
    tile_n = min(tile_n, _round_up(N, 8))

    tiles_total = pl.cdiv(N, tile_n)
    tiles_per_core = pl.cdiv(tiles_total, NUM_CORES)
    n_pad = NUM_CORES * tiles_per_core * tile_n

    def pad_rows(x2d, fill):
        pad = n_pad - x2d.shape[0]
        if pad == 0:
            return x2d
        return jnp.pad(x2d, ((0, pad), (0, 0)), constant_values=fill)

    # keep logits in their native dtype; cast to f32 inside the kernel only
    slog = pad_rows(start_logits.reshape(N, L), 0)
    elog = pad_rows(end_logits.reshape(N, L), 0)
    spos = pad_rows(start_positions.reshape(N, 1).astype(jnp.int32), 0)
    epos = pad_rows(end_positions.reshape(N, 1).astype(jnp.int32), 0)
    mask = pad_rows(attention_mask.reshape(N, 1).astype(jnp.int32), 0)  # pad rows -> mask 0

    row_spec_l = pl.BlockSpec((tile_n, L), lambda c, t: (c * tiles_per_core + t, 0))
    row_spec_1 = pl.BlockSpec((tile_n, 1), lambda c, t: (c * tiles_per_core + t, 0))
    out_spec = pl.BlockSpec((8, 128), lambda c, t: (c, 0))

    # explicit VMEM budget: 2 logits inputs x 2 buffers x tile, plus small stuff
    tile_logit_bytes = tile_n * L * itemsize
    needed = (2 * 2 * tile_logit_bytes        # logits, double-buffered
              + 3 * 2 * tile_n * 4            # mask / positions blocks
              + 3 * tile_n * 4                # accumulator scratch
              + 2 * 8 * 128 * 4)              # output blocks
    vmem_limit = int(min(max(needed + (8 << 20), 32 << 20), 56 << 20))

    partials = pl.pallas_call(
        _span_loss_kernel,
        out_shape=jax.ShapeDtypeStruct((NUM_CORES * 8, 128), jnp.float32),
        grid=(NUM_CORES, tiles_per_core),
        in_specs=[row_spec_1, row_spec_1, row_spec_1, row_spec_l, row_spec_l],
        out_specs=out_spec,
        scratch_shapes=[pltpu.VMEM((tile_n, 1), jnp.float32),
                        pltpu.VMEM((tile_n, 1), jnp.float32),
                        pltpu.VMEM((tile_n, 1), jnp.float32)],
        compiler_params=pltpu.CompilerParams(
            dimension_semantics=("parallel", "arbitrary"),
            vmem_limit_bytes=vmem_limit),
    )(mask, spos, epos, slog, elog)

    # combine per-core partial sums (all unused slots are exactly 0)
    sums = jnp.sum(partials, axis=0)           # (128,)
    start_sum, end_sum, cnt = sums[0], sums[1], sums[2]
    start_loss = start_sum / cnt               # NaN/Inf if no active token, like PyTorch
    end_loss = end_sum / cnt
    total = 0.5 * (start_loss + end_loss)
    return total, start_loss, end_loss


def _reference(attention_mask, start_logits, end_logits,
               start_positions, end_positions):
    """Pure-JAX reference matching torch.nn.CrossEntropyLoss (mean reduction)."""
    B, S, L = start_logits.shape
    m = (attention_mask.reshape(-1) == 1).astype(jnp.float32)

    def ce(logits, labels):
        logits = logits.reshape(-1, L).astype(jnp.float32)
        labels = labels.reshape(-1)
        logp = jax.nn.log_softmax(logits, axis=-1)
        nll = -jnp.take_along_axis(logp, labels[:, None], axis=-1)[:, 0]
        return jnp.sum(nll * m) / jnp.sum(m)

    sl = ce(start_logits, start_positions)
    el = ce(end_logits, end_positions)
    return (sl + el) / 2.0, sl, el


if __name__ == "__main__":
    key = jax.random.PRNGKey(0)
    B, S, L = 2, 16, 8  # batch, sequence_length, num_labels

    k1, k2, k3, k4 = jax.random.split(key, 4)
    start_logits = jax.random.normal(k1, (B, S, L), dtype=jnp.float32)
    end_logits = jax.random.normal(k2, (B, S, L), dtype=jnp.float32)
    start_positions = jax.random.randint(k3, (B, S), 0, L, dtype=jnp.int32)
    end_positions = jax.random.randint(k4, (B, S), 0, L, dtype=jnp.int32)

    # attention_mask: first `len_b` tokens active per batch row
    lengths = jnp.array([12, 7], dtype=jnp.int32)
    attention_mask = (jnp.arange(S)[None, :] < lengths[:, None]).astype(jnp.int32)

    total, sl, el = span_loss(attention_mask, start_logits, end_logits,
                              start_positions, end_positions)
    jax.block_until_ready((total, sl, el))

    rt, rs, re = _reference(attention_mask, start_logits, end_logits,
                            start_positions, end_positions)
    assert jnp.allclose(total, rt, atol=1e-5), (total, rt)
    assert jnp.allclose(sl, rs, atol=1e-5), (sl, rs)
    assert jnp.allclose(el, re, atol=1e-5), (el, re)

    # TODO(synk): for num_labels << 128 a row-folding lane-dense layout would
    # recover the wasted lanes; skipped since it breaks the simple per-row LSE.

    print("KERNEL_OK")
</pallas_src>

<mosaic_0001>
module attributes {stable_mosaic.version = 11 : i64} {
  func.func @_span_loss_kernel(%arg0: i32, %arg1: i32, %arg2: memref<32x1xi32, #tpu.memory_space<vmem>>, %arg3: memref<32x1xi32, #tpu.memory_space<vmem>>, %arg4: memref<32x1xi32, #tpu.memory_space<vmem>>, %arg5: memref<32x8xf32, #tpu.memory_space<vmem>>, %arg6: memref<32x8xf32, #tpu.memory_space<vmem>>, %arg7: memref<8x128xf32, #tpu.memory_space<vmem>>, %arg8: memref<32x1xf32, #tpu.memory_space<vmem>>, %arg9: memref<32x1xf32, #tpu.memory_space<vmem>>, %arg10: memref<32x1xf32, #tpu.memory_space<vmem>>) attributes {dimension_semantics = [#tpu.dimension_semantics<parallel>, #tpu.dimension_semantics<arbitrary>], iteration_bounds = array<i64: 2, 1>, scalar_prefetch = 0 : i64, scratch_operands = 3 : i64, tpu.core_type = #tpu.core_type<tc>, window_params = [{transform_indices = @transform_0, window_bounds = array<i64: 32, 1>}, {transform_indices = @transform_1, window_bounds = array<i64: 32, 1>}, {transform_indices = @transform_2, window_bounds = array<i64: 32, 1>}, {transform_indices = @transform_3, window_bounds = array<i64: 32, 8>}, {transform_indices = @transform_4, window_bounds = array<i64: 32, 8>}, {transform_indices = @transform_5, window_bounds = array<i64: 8, 128>}]} {
    %c0_i32 = arith.constant 0 : i32
    %0 = arith.cmpi eq, %arg1, %c0_i32 : i32
    %1 = arith.extui %0 : i1 to i32
    %c0_i32_0 = arith.constant 0 : i32
    %2 = arith.cmpi ne, %1, %c0_i32_0 : i32
    scf.if %2 {
      %cst_31 = arith.constant 0.000000e+00 : f32
      %59 = vector.broadcast %cst_31 : f32 to vector<32x1xf32>
      %c0_32 = arith.constant 0 : index
      %c0_33 = arith.constant 0 : index
      %60 = vector.load %arg8[%c0_32, %c0_33] : memref<32x1xf32, #tpu.memory_space<vmem>>, vector<32x1xf32>
      tpu.vector_store %arg8[%c0_32, %c0_33], %59 {strides = array<i32>} : memref<32x1xf32, #tpu.memory_space<vmem>>, vector<32x1xf32>,
      %cst_34 = arith.constant 0.000000e+00 : f32
      %61 = vector.broadcast %cst_34 : f32 to vector<32x1xf32>
      %c0_35 = arith.constant 0 : index
      %c0_36 = arith.constant 0 : index
      %62 = vector.load %arg9[%c0_35, %c0_36] : memref<32x1xf32, #tpu.memory_space<vmem>>, vector<32x1xf32>
      tpu.vector_store %arg9[%c0_35, %c0_36], %61 {strides = array<i32>} : memref<32x1xf32, #tpu.memory_space<vmem>>, vector<32x1xf32>,
      %cst_37 = arith.constant 0.000000e+00 : f32
      %63 = vector.broadcast %cst_37 : f32 to vector<32x1xf32>
      %c0_38 = arith.constant 0 : index
      %c0_39 = arith.constant 0 : index
      %64 = vector.load %arg10[%c0_38, %c0_39] : memref<32x1xf32, #tpu.memory_space<vmem>>, vector<32x1xf32>
      tpu.vector_store %arg10[%c0_38, %c0_39], %63 {strides = array<i32>} : memref<32x1xf32, #tpu.memory_space<vmem>>, vector<32x1xf32>,
    } else {
    }
    %c0 = arith.constant 0 : index
    %c0_1 = arith.constant 0 : index
    %3 = vector.load %arg5[%c0, %c0_1] : memref<32x8xf32, #tpu.memory_space<vmem>>, vector<32x8xf32>
    %c0_2 = arith.constant 0 : index
    %c0_3 = arith.constant 0 : index
    %4 = vector.load %arg6[%c0_2, %c0_3] : memref<32x8xf32, #tpu.memory_space<vmem>>, vector<32x8xf32>
    %c0_4 = arith.constant 0 : index
    %c0_5 = arith.constant 0 : index
    %5 = vector.load %arg3[%c0_4, %c0_5] : memref<32x1xi32, #tpu.memory_space<vmem>>, vector<32x1xi32>
    %c0_6 = arith.constant 0 : index
    %c0_7 = arith.constant 0 : index
    %6 = vector.load %arg4[%c0_6, %c0_7] : memref<32x1xi32, #tpu.memory_space<vmem>>, vector<32x1xi32>
    %c0_8 = arith.constant 0 : index
    %c0_9 = arith.constant 0 : index
    %7 = vector.load %arg2[%c0_8, %c0_9] : memref<32x1xi32, #tpu.memory_space<vmem>>, vector<32x1xi32>
    %c1_i32 = arith.constant 1 : i32
    %8 = vector.broadcast %c1_i32 : i32 to vector<32x1xi32>
    %9 = arith.cmpi eq, %7, %8 : vector<32x1xi32>
    %10 = arith.extui %9 : vector<32x1xi1> to vector<32x1xi32>
    %11 = arith.sitofp %10 : vector<32x1xi32> to vector<32x1xf32>
    %12 = tpu.iota {dimensions = array<i32: 1>} : vector<32x8xi32>
    %c0_10 = arith.constant 0 : index
    %c0_11 = arith.constant 0 : index
    %13 = vector.load %arg8[%c0_10, %c0_11] : memref<32x1xf32, #tpu.memory_space<vmem>>, vector<32x1xf32>
    %cst = arith.constant dense<0xFF800000> : vector<32xf32>
    %14 = vector.multi_reduction <maximumf>, %3, %cst [1] : vector<32x8xf32> to vector<32xf32>
    %15 = vector.shape_cast %14 : vector<32xf32> to vector<32x1xf32>
    %16 = vector.broadcast %15 : vector<32x1xf32> to vector<32x8xf32>
    %17 = arith.subf %3, %16 : vector<32x8xf32>
    %18 = math.exp %17 : vector<32x8xf32>
    %cst_12 = arith.constant dense<0.000000e+00> : vector<32xf32>
    %19 = vector.multi_reduction <add>, %18, %cst_12 [1] : vector<32x8xf32> to vector<32xf32>
    %20 = vector.shape_cast %19 : vector<32xf32> to vector<32x1xf32>
    %21 = vector.broadcast %5 : vector<32x1xi32> to vector<32x8xi32>
    %22 = arith.cmpi eq, %12, %21 : vector<32x8xi32>
    %cst_13 = arith.constant 0.000000e+00 : f32
    %23 = vector.broadcast %cst_13 : f32 to vector<32x8xf32>
    %24 = arith.select %22, %3, %23 : vector<32x8xi1>, vector<32x8xf32>
    %cst_14 = arith.constant dense<0.000000e+00> : vector<32xf32>
    %25 = vector.multi_reduction <add>, %24, %cst_14 [1] : vector<32x8xf32> to vector<32xf32>
    %26 = vector.shape_cast %25 : vector<32xf32> to vector<32x1xf32>
    %27 = math.log %20 : vector<32x1xf32>
    %28 = arith.addf %15, %27 : vector<32x1xf32>
    %29 = arith.subf %28, %26 : vector<32x1xf32>
    %30 = arith.mulf %29, %11 : vector<32x1xf32>
    %31 = arith.addf %13, %30 : vector<32x1xf32>
    %c0_15 = arith.constant 0 : index
    %c0_16 = arith.constant 0 : index
    %32 = vector.load %arg8[%c0_15, %c0_16] : memref<32x1xf32, #tpu.memory_space<vmem>>, vector<32x1xf32>
    tpu.vector_store %arg8[%c0_15, %c0_16], %31 {strides = array<i32>} : memref<32x1xf32, #tpu.memory_space<vmem>>, vector<32x1xf32>,
    %c0_17 = arith.constant 0 : index
    %c0_18 = arith.constant 0 : index
    %33 = vector.load %arg9[%c0_17, %c0_18] : memref<32x1xf32, #tpu.memory_space<vmem>>, vector<32x1xf32>
    %cst_19 = arith.constant dense<0xFF800000> : vector<32xf32>
    %34 = vector.multi_reduction <maximumf>, %4, %cst_19 [1] : vector<32x8xf32> to vector<32xf32>
    %35 = vector.shape_cast %34 : vector<32xf32> to vector<32x1xf32>
    %36 = vector.broadcast %35 : vector<32x1xf32> to vector<32x8xf32>
    %37 = arith.subf %4, %36 : vector<32x8xf32>
    %38 = math.exp %37 : vector<32x8xf32>
    %cst_20 = arith.constant dense<0.000000e+00> : vector<32xf32>
    %39 = vector.multi_reduction <add>, %38, %cst_20 [1] : vector<32x8xf32> to vector<32xf32>
    %40 = vector.shape_cast %39 : vector<32xf32> to vector<32x1xf32>
    %41 = vector.broadcast %6 : vector<32x1xi32> to vector<32x8xi32>
    %42 = arith.cmpi eq, %12, %41 : vector<32x8xi32>
    %cst_21 = arith.constant 0.000000e+00 : f32
    %43 = vector.broadcast %cst_21 : f32 to vector<32x8xf32>
    %44 = arith.select %42, %4, %43 : vector<32x8xi1>, vector<32x8xf32>
    %cst_22 = arith.constant dense<0.000000e+00> : vector<32xf32>
    %45 = vector.multi_reduction <add>, %44, %cst_22 [1] : vector<32x8xf32> to vector<32xf32>
    %46 = vector.shape_cast %45 : vector<32xf32> to vector<32x1xf32>
    %47 = math.log %40 : vector<32x1xf32>
    %48 = arith.addf %35, %47 : vector<32x1xf32>
    %49 = arith.subf %48, %46 : vector<32x1xf32>
    %50 = arith.mulf %49, %11 : vector<32x1xf32>
    %51 = arith.addf %33, %50 : vector<32x1xf32>
    %c0_23 = arith.constant 0 : index
    %c0_24 = arith.constant 0 : index
    %52 = vector.load %arg9[%c0_23, %c0_24] : memref<32x1xf32, #tpu.memory_space<vmem>>, vector<32x1xf32>
    tpu.vector_store %arg9[%c0_23, %c0_24], %51 {strides = array<i32>} : memref<32x1xf32, #tpu.memory_space<vmem>>, vector<32x1xf32>,
    %c0_25 = arith.constant 0 : index
    %c0_26 = arith.constant 0 : index
    %53 = vector.load %arg10[%c0_25, %c0_26] : memref<32x1xf32, #tpu.memory_space<vmem>>, vector<32x1xf32>
    %54 = arith.addf %53, %11 : vector<32x1xf32>
    %c0_27 = arith.constant 0 : index
    %c0_28 = arith.constant 0 : index
    %55 = vector.load %arg10[%c0_27, %c0_28] : memref<32x1xf32, #tpu.memory_space<vmem>>, vector<32x1xf32>
    tpu.vector_store %arg10[%c0_27, %c0_28], %54 {strides = array<i32>} : memref<32x1xf32, #tpu.memory_space<vmem>>, vector<32x1xf32>,
    %c0_i32_29 = arith.constant 0 : i32
    %56 = arith.cmpi eq, %arg1, %c0_i32_29 : i32
    %57 = arith.extui %56 : i1 to i32
    %c0_i32_30 = arith.constant 0 : i32
    %58 = arith.cmpi ne, %57, %c0_i32_30 : i32
    scf.if %58 {
      %c0_31 = arith.constant 0 : index
      %c0_32 = arith.constant 0 : index
      %59 = vector.load %arg8[%c0_31, %c0_32] : memref<32x1xf32, #tpu.memory_space<vmem>>, vector<32x1xf32>
      %60 = vector.shape_cast %59 : vector<32x1xf32> to vector<1x32x1xf32>
      %cst_33 = arith.constant dense<0.000000e+00> : vector<1xf32>
      %61 = vector.multi_reduction <add>, %60, %cst_33 [1, 2] : vector<1x32x1xf32> to vector<1xf32>
      %62 = vector.shape_cast %61 : vector<1xf32> to vector<1x1x1xf32>
      %63 = vector.extract %62[0, 0, 0] : f32 from vector<1x1x1xf32>
      %c0_34 = arith.constant 0 : index
      %c0_35 = arith.constant 0 : index
      %64 = vector.load %arg9[%c0_34, %c0_35] : memref<32x1xf32, #tpu.memory_space<vmem>>, vector<32x1xf32>
      %65 = vector.shape_cast %64 : vector<32x1xf32> to vector<1x32x1xf32>
      %cst_36 = arith.constant dense<0.000000e+00> : vector<1xf32>
      %66 = vector.multi_reduction <add>, %65, %cst_36 [1, 2] : vector<1x32x1xf32> to vector<1xf32>
      %67 = vector.shape_cast %66 : vector<1xf32> to vector<1x1x1xf32>
      %68 = vector.extract %67[0, 0, 0] : f32 from vector<1x1x1xf32>
      %c0_37 = arith.constant 0 : index
      %c0_38 = arith.constant 0 : index
      %69 = vector.load %arg10[%c0_37, %c0_38] : memref<32x1xf32, #tpu.memory_space<vmem>>, vector<32x1xf32>
      %70 = vector.shape_cast %69 : vector<32x1xf32> to vector<1x32x1xf32>
      %cst_39 = arith.constant dense<0.000000e+00> : vector<1xf32>
      %71 = vector.multi_reduction <add>, %70, %cst_39 [1, 2] : vector<1x32x1xf32> to vector<1xf32>
      %72 = vector.shape_cast %71 : vector<1xf32> to vector<1x1x1xf32>
      %73 = vector.extract %72[0, 0, 0] : f32 from vector<1x1x1xf32>
      %74 = tpu.iota {dimensions = array<i32: 0>} : vector<8x128xi32>
      %75 = tpu.iota {dimensions = array<i32: 1>} : vector<8x128xi32>
      %c0_i32_40 = arith.constant 0 : i32
      %76 = vector.broadcast %c0_i32_40 : i32 to vector<8x128xi32>
      %77 = arith.cmpi eq, %74, %76 : vector<8x128xi32>
      %c0_i32_41 = arith.constant 0 : i32
      %78 = vector.broadcast %c0_i32_41 : i32 to vector<8x128xi32>
      %79 = arith.cmpi eq, %75, %78 : vector<8x128xi32>
      %80 = arith.andi %77, %79 : vector<8x128xi1>
      %c1_i32_42 = arith.constant 1 : i32
      %81 = vector.broadcast %c1_i32_42 : i32 to vector<8x128xi32>
      %82 = arith.cmpi eq, %75, %81 : vector<8x128xi32>
      %83 = arith.andi %77, %82 : vector<8x128xi1>
      %c2_i32 = arith.constant 2 : i32
      %84 = vector.broadcast %c2_i32 : i32 to vector<8x128xi32>
      %85 = arith.cmpi eq, %75, %84 : vector<8x128xi32>
      %86 = arith.andi %77, %85 : vector<8x128xi1>
      %cst_43 = arith.constant 0.000000e+00 : f32
      %87 = vector.broadcast %73 : f32 to vector<8x128xf32>
      %88 = vector.broadcast %cst_43 : f32 to vector<8x128xf32>
      %89 = arith.select %86, %87, %88 : vector<8x128xi1>, vector<8x128xf32>
      %90 = vector.broadcast %68 : f32 to vector<8x128xf32>
      %91 = arith.select %83, %90, %89 : vector<8x128xi1>, vector<8x128xf32>
      %92 = vector.broadcast %63 : f32 to vector<8x128xf32>
      %93 = arith.select %80, %92, %91 : vector<8x128xi1>, vector<8x128xf32>
      %c0_44 = arith.constant 0 : index
      %c0_45 = arith.constant 0 : index
      %94 = vector.load %arg7[%c0_44, %c0_45] : memref<8x128xf32, #tpu.memory_space<vmem>>, vector<8x128xf32>
      tpu.vector_store %arg7[%c0_44, %c0_45], %93 {strides = array<i32>} : memref<8x128xf32, #tpu.memory_space<vmem>>, vector<8x128xf32>,
    } else {
    }
    return
  }
  func.func @transform_0(%arg0: i32, %arg1: i32) -> (i32, i32) {
    %c1_i32 = arith.constant 1 : i32
    %0 = arith.muli %arg0, %c1_i32 : i32
    %1 = arith.addi %0, %arg1 : i32
    %c0_i32 = arith.constant 0 : i32
    %c0_i32_0 = arith.constant 0 : i32
    return %1, %c0_i32 : i32, i32
  }
  func.func @transform_1(%arg0: i32, %arg1: i32) -> (i32, i32) {
    %c1_i32 = arith.constant 1 : i32
    %0 = arith.muli %arg0, %c1_i32 : i32
    %1 = arith.addi %0, %arg1 : i32
    %c0_i32 = arith.constant 0 : i32
    %c0_i32_0 = arith.constant 0 : i32
    return %1, %c0_i32 : i32, i32
  }
  func.func @transform_2(%arg0: i32, %arg1: i32) -> (i32, i32) {
    %c1_i32 = arith.constant 1 : i32
    %0 = arith.muli %arg0, %c1_i32 : i32
    %1 = arith.addi %0, %arg1 : i32
    %c0_i32 = arith.constant 0 : i32
    %c0_i32_0 = arith.constant 0 : i32
    return %1, %c0_i32 : i32, i32
  }
  func.func @transform_3(%arg0: i32, %arg1: i32) -> (i32, i32) {
    %c1_i32 = arith.constant 1 : i32
    %0 = arith.muli %arg0, %c1_i32 : i32
    %1 = arith.addi %0, %arg1 : i32
    %c0_i32 = arith.constant 0 : i32
    %c0_i32_0 = arith.constant 0 : i32
    return %1, %c0_i32 : i32, i32
  }
  func.func @transform_4(%arg0: i32, %arg1: i32) -> (i32, i32) {
    %c1_i32 = arith.constant 1 : i32
    %0 = arith.muli %arg0, %c1_i32 : i32
    %1 = arith.addi %0, %arg1 : i32
    %c0_i32 = arith.constant 0 : i32
    %c0_i32_0 = arith.constant 0 : i32
    return %1, %c0_i32 : i32, i32
  }
  func.func @transform_5(%arg0: i32, %arg1: i32) -> (i32, i32) {
    %c0_i32 = arith.constant 0 : i32
    %c0_i32_0 = arith.constant 0 : i32
    return %arg0, %c0_i32 : i32, i32
  }
}

</mosaic_0001>

<llo_original>
// kernel: tpu_custom_call.1
$region0: #{tpu_custom_call.1}
  #allocation0 [shape = 'u32[]', space=smem, size = 0x4, offset = 0x4, fixed_abs, tag = 'smem constant byte address 0x4 - core index']
  #allocation1 [shape = 'u32[144,128]{1,0:T(1,128)}', space=vmem, size = 0x12000, scoped, tag = 'internal scratch']
  #allocation2 [shape = 'f32[32,1]{1,0:T(8,128)}', space=vmem, size = 0x4000, scoped, tag = 'scratch operand']
  #allocation3 [shape = 'f32[32,1]{1,0:T(8,128)}', space=vmem, size = 0x4000, scoped, tag = 'scratch operand']
  #allocation4 [shape = 'f32[32,1]{1,0:T(8,128)}', space=vmem, size = 0x4000, scoped, tag = 'scratch operand']
  %s0 = inlined_call_operand.vmem [shape: s32[64,1], index: 0, kind: input, shape index: {}]
  %s1 = inlined_call_operand.vmem [shape: s32[64,1], index: 1, kind: input, shape index: {}]
  %s2 = inlined_call_operand.vmem [shape: s32[64,1], index: 2, kind: input, shape index: {}]
  %s3 = inlined_call_operand.vmem [shape: f32[64,8], index: 3, kind: input, shape index: {}]
  %s4 = inlined_call_operand.vmem [shape: f32[64,8], index: 4, kind: input, shape index: {}]
  %s5 = inlined_call_operand.hbm [shape: f32[16,128], index: 5, kind: output, shape index: {}]
  %s6 = sld [smem:[#allocation0]]
  $region61: #{tpu_custom_call.1} parent=0
    _
  %s8 = ssub.s32 1, %s6
  %s9 = scalar_select 0, %s8, %s6
  $region1: #{tpu_custom_call.1} parent=0
    #allocation5 [shape = 'u8[8192]{0}', space=vmem, size = 0x2000, scoped, tag = 'output window, operand 0']
    #allocation6 [shape = 's32[2]{0}', space=sflag, size = 0x8, scoped, tag = 'scoped memory for tpu_custom_call.1']
    %10 = vsyncpa [#allocation6], 0
    %s11 = scalar_lea.sflag [#allocation6], 1
    %12 = vsyncpa %s11, 0
    loop: start=0, step=1, limit=4
    $region2: #{tpu_custom_call.1} parent=1 // loop_pre_header
      _
    $region3: #{tpu_custom_call.1} parent=1 // loop_header
      %s14 = sphi 0, %s18
      %p15 = scmp.ge.s32.totalorder %s14, 4
      %s21 = sphi 0, %s33
      %s22 = sphi 0, %s29
      %s23 = sphi 0, %s21
      %s24 = sphi 0, %s22
      %s25 = sphi 0, %s23
      %s26 = sphi 0, %s24
      %s38 = sphi 0, %s40
      %s41 = sphi 0, %s38
      %s42 = sphi 0, %s41
      %s58 = sphi 0, %s42
      %s66 = sphi 0, %s68
      %s69 = sphi 0, %s66
      %s70 = sphi 0, %s69
      %s86 = sphi 0, %s70
      %s94 = sphi 0, %s96
      %s97 = sphi 0, %s94
      %s98 = sphi 0, %s97
      %s114 = sphi 0, %s98
      %s122 = sphi 0, %s124
      %s125 = sphi 0, %s122
      %s126 = sphi 0, %s125
      %s142 = sphi 0, %s126
      %s150 = sphi 0, %s152
      %s153 = sphi 0, %s150
      %s154 = sphi 0, %s153
      %s170 = sphi 0, %s154
      %s176 = sphi 0, %s178
      %s179 = sphi 0, %s176
      %s180 = sphi 0, %s179
      %s196 = sphi 0, %s180
    $region4: #{tpu_custom_call.1} parent=1 // loop_header_branch
      %17 = sbr.rel (%p15) target = $region8
    $region5: #{tpu_custom_call.1} parent=1 // loop_body
      %s19 = ssub.s32 %s14, 1
      %s20 = ssub.s32 %s14, 2
      %s27 = sadd.s32 1, %s22
      %p28 = scmp.ge.s32.totalorder %s27, 1
      %s29 = scalar_select %p28, 0, %s27
      %s30 = sadd.s32 1, %s21
      %s31 = scalar_select %p28, %s30, %s21
      %p32 = scmp.ge.s32.totalorder %s31, 2
      %s33 = scalar_select %p32, 0, %s31
      %s34 = sadd.s32 %s21, %s22
      %s35 = sadd.s32 %s33, %s29
      %s36 = ssub.s32 %s34, %s35
      %p37 = scmp.eq.s32.totalorder %s36, 0
      %s39 = sadd.s32 %s38, 1
      %s40 = scalar_select %p37, %s38, %s39
      %p43 = pneg %p37
      %p44 = scmp.eq.s32.totalorder %s14, 1
      %p45 = por %p43, %p44
      %p46 = scmp.ne.s32.totalorder %s38, %s41
      %p47 = scmp.eq.s32.totalorder %s14, 0
      %p48 = por %p46, %p47
      %p49 = scmp.ne.s32.totalorder %s38, %s41
      %p50 = scmp.eq.s32.totalorder %s19, 1
      %p51 = por %p49, %p50
      %p52 = scmp.ne.s32.totalorder %s41, %s42
      %p53 = scmp.eq.s32.totalorder %s19, 0
      %p54 = por %p52, %p53
      %p55 = scmp.ne.s32.totalorder %s41, %s42
      %p56 = scmp.eq.s32.totalorder %s20, 1
      %p57 = por %p55, %p56
      %p59 = scmp.ne.s32.totalorder %s42, %s58
      %p60 = scmp.eq.s32.totalorder %s20, 0
      %p61 = por %p59, %p60
      %s62 = sadd.s32 %s21, %s22
      %s63 = sadd.s32 %s33, %s29
      %s64 = ssub.s32 %s62, %s63
      %p65 = scmp.eq.s32.totalorder %s64, 0
      %s67 = sadd.s32 %s66, 1
      %s68 = scalar_select %p65, %s66, %s67
      %p71 = pneg %p65
      %p72 = scmp.eq.s32.totalorder %s14, 1
      %p73 = por %p71, %p72
      %p74 = scmp.ne.s32.totalorder %s66, %s69
      %p75 = scmp.eq.s32.totalorder %s14, 0
      %p76 = por %p74, %p75
      %p77 = scmp.ne.s32.totalorder %s66, %s69
      %p78 = scmp.eq.s32.totalorder %s19, 1
      %p79 = por %p77, %p78
      %p80 = scmp.ne.s32.totalorder %s69, %s70
      %p81 = scmp.eq.s32.totalorder %s19, 0
      %p82 = por %p80, %p81
      %p83 = scmp.ne.s32.totalorder %s69, %s70
      %p84 = scmp.eq.s32.totalorder %s20, 1
      %p85 = por %p83, %p84
      %p87 = scmp.ne.s32.totalorder %s70, %s86
      %p88 = scmp.eq.s32.totalorder %s20, 0
      %p89 = por %p87, %p88
      %s90 = sadd.s32 %s21, %s22
      %s91 = sadd.s32 %s33, %s29
      %s92 = ssub.s32 %s90, %s91
      %p93 = scmp.eq.s32.totalorder %s92, 0
      %s95 = sadd.s32 %s94, 1
      %s96 = scalar_select %p93, %s94, %s95
      %p99 = pneg %p93
      %p100 = scmp.eq.s32.totalorder %s14, 1
      %p101 = por %p99, %p100
      %p102 = scmp.ne.s32.totalorder %s94, %s97
      %p103 = scmp.eq.s32.totalorder %s14, 0
      %p104 = por %p102, %p103
      %p105 = scmp.ne.s32.totalorder %s94, %s97
      %p106 = scmp.eq.s32.totalorder %s19, 1
      %p107 = por %p105, %p106
      %p108 = scmp.ne.s32.totalorder %s97, %s98
      %p109 = scmp.eq.s32.totalorder %s19, 0
      %p110 = por %p108, %p109
      %p111 = scmp.ne.s32.totalorder %s97, %s98
      %p112 = scmp.eq.s32.totalorder %s20, 1
      %p113 = por %p111, %p112
      %p115 = scmp.ne.s32.totalorder %s98, %s114
      %p116 = scmp.eq.s32.totalorder %s20, 0
      %p117 = por %p115, %p116
      %s118 = sadd.s32 %s21, %s22
      %s119 = sadd.s32 %s33, %s29
      %s120 = ssub.s32 %s118, %s119
      %p121 = scmp.eq.s32.totalorder %s120, 0
      %s123 = sadd.s32 %s122, 1
      %s124 = scalar_select %p121, %s122, %s123
      %p127 = pneg %p121
      %p128 = scmp.eq.s32.totalorder %s14, 1
      %p129 = por %p127, %p128
      %p130 = scmp.ne.s32.totalorder %s122, %s125
      %p131 = scmp.eq.s32.totalorder %s14, 0
      %p132 = por %p130, %p131
      %p133 = scmp.ne.s32.totalorder %s122, %s125
      %p134 = scmp.eq.s32.totalorder %s19, 1
      %p135 = por %p133, %p134
      %p136 = scmp.ne.s32.totalorder %s125, %s126
      %p137 = scmp.eq.s32.totalorder %s19, 0
      %p138 = por %p136, %p137
      %p139 = scmp.ne.s32.totalorder %s125, %s126
      %p140 = scmp.eq.s32.totalorder %s20, 1
      %p141 = por %p139, %p140
      %p143 = scmp.ne.s32.totalorder %s126, %s142
      %p144 = scmp.eq.s32.totalorder %s20, 0
      %p145 = por %p143, %p144
      %s146 = sadd.s32 %s21, %s22
      %s147 = sadd.s32 %s33, %s29
      %s148 = ssub.s32 %s146, %s147
      %p149 = scmp.eq.s32.totalorder %s148, 0
      %s151 = sadd.s32 %s150, 1
      %s152 = scalar_select %p149, %s150, %s151
      %p155 = pneg %p149
      %p156 = scmp.eq.s32.totalorder %s14, 1
      %p157 = por %p155, %p156
      %p158 = scmp.ne.s32.totalorder %s150, %s153
      %p159 = scmp.eq.s32.totalorder %s14, 0
      %p160 = por %p158, %p159
      %p161 = scmp.ne.s32.totalorder %s150, %s153
      %p162 = scmp.eq.s32.totalorder %s19, 1
      %p163 = por %p161, %p162
      %p164 = scmp.ne.s32.totalorder %s153, %s154
      %p165 = scmp.eq.s32.totalorder %s19, 0
      %p166 = por %p164, %p165
      %p167 = scmp.ne.s32.totalorder %s153, %s154
      %p168 = scmp.eq.s32.totalorder %s20, 1
      %p169 = por %p167, %p168
      %p171 = scmp.ne.s32.totalorder %s154, %s170
      %p172 = scmp.eq.s32.totalorder %s20, 0
      %p173 = por %p171, %p172
      %s174 = ssub.s32 %s21, %s33
      %p175 = scmp.eq.s32.totalorder %s174, 0
      %s177 = sadd.s32 %s176, 1
      %s178 = scalar_select %p175, %s176, %s177
      %p181 = pneg %p175
      %p182 = scmp.eq.s32.totalorder %s14, 1
      %p183 = por %p181, %p182
      %p184 = scmp.ne.s32.totalorder %s176, %s179
      %p185 = scmp.eq.s32.totalorder %s14, 0
      %p186 = por %p184, %p185
      %p187 = scmp.ne.s32.totalorder %s176, %s179
      %p188 = scmp.eq.s32.totalorder %s19, 1
      %p189 = por %p187, %p188
      %p190 = scmp.ne.s32.totalorder %s179, %s180
      %p191 = scmp.eq.s32.totalorder %s19, 0
      %p192 = por %p190, %p191
      %p193 = scmp.ne.s32.totalorder %s179, %s180
      %p194 = scmp.eq.s32.totalorder %s20, 1
      %p195 = por %p193, %p194
      %p197 = scmp.ne.s32.totalorder %s180, %s196
      %p198 = scmp.eq.s32.totalorder %s20, 0
      %p199 = por %p197, %p198
      %p200 = scmp.le.s32.totalorder 1, %s14
      %p201 = scmp.lt.s32.totalorder %s14, 3
      %p202 = pnand %p200, %p201
      %p203 = pneg %p202
      // Predicated region
      $region9: #{tpu_custom_call.1} parent=5 // pred_check
        _
      $region10: #{tpu_custom_call.1} parent=5 // pred_check_branch
        %205 = sbr.rel (%p202) target = $region12
      $region11: #{tpu_custom_call.1} parent=5 // pred_region
        %s206 = ssub.s32 %s14, 1
      $region12: #{tpu_custom_call.1} parent=5 // pred_fallthru
        _
      %p207 = scmp.lt.s32.totalorder %s14, 2
      // Predicated region
      $region13: #{tpu_custom_call.1} parent=5 // pred_check
        %p208 = pneg %p207
      $region14: #{tpu_custom_call.1} parent=5 // pred_check_branch
        %210 = sbr.rel (%p208) target = $region16
      $region15: #{tpu_custom_call.1} parent=5 // pred_region
        // Predicated region
        $region17: #{tpu_custom_call.1} parent=15 // pred_check
          %p211 = pneg %p48
        $region18: #{tpu_custom_call.1} parent=15 // pred_check_branch
          %213 = sbr.rel (%p211) target = $region20
        $region19: #{tpu_custom_call.1} parent=15 // pred_region
          %s214 = sadd.s32 %s21, %s22
          %s215 = smul.u32 4, %s214
          %p216 = scmp.lt.s32.totalorder %s215, 7
          %s217 = scalar_select %p216, %s215, 7
          %s218 = smul.addr %s217, 8
          %s219 = scalar_lea.vmem %s0, %s218
          %s220 = sadd.s32 %s21, %s22
          %s221 = smul.u32 4, %s220
        $region20: #{tpu_custom_call.1} parent=15 // pred_fallthru
          _
        // Predicated region
        $region21: #{tpu_custom_call.1} parent=15 // pred_check
          %p222 = pneg %p76
        $region22: #{tpu_custom_call.1} parent=15 // pred_check_branch
          %224 = sbr.rel (%p222) target = $region24
        $region23: #{tpu_custom_call.1} parent=15 // pred_region
          %s225 = sadd.s32 %s21, %s22
          %s226 = smul.u32 4, %s225
          %p227 = scmp.lt.s32.totalorder %s226, 7
          %s228 = scalar_select %p227, %s226, 7
          %s229 = smul.addr %s228, 8
          %s230 = scalar_lea.vmem %s1, %s229
          %s231 = sadd.s32 %s21, %s22
          %s232 = smul.u32 4, %s231
        $region24: #{tpu_custom_call.1} parent=15 // pred_fallthru
          _
        // Predicated region
        $region25: #{tpu_custom_call.1} parent=15 // pred_check
          %p233 = pneg %p104
        $region26: #{tpu_custom_call.1} parent=15 // pred_check_branch
          %235 = sbr.rel (%p233) target = $region28
        $region27: #{tpu_custom_call.1} parent=15 // pred_region
          %s236 = sadd.s32 %s21, %s22
          %s237 = smul.u32 4, %s236
          %p238 = scmp.lt.s32.totalorder %s237, 7
          %s239 = scalar_select %p238, %s237, 7
          %s240 = smul.addr %s239, 8
          %s241 = scalar_lea.vmem %s2, %s240
          %s242 = sadd.s32 %s21, %s22
          %s243 = smul.u32 4, %s242
        $region28: #{tpu_custom_call.1} parent=15 // pred_fallthru
          _
        // Predicated region
        $region29: #{tpu_custom_call.1} parent=15 // pred_check
          %p244 = pneg %p132
        $region30: #{tpu_custom_call.1} parent=15 // pred_check_branch
          %246 = sbr.rel (%p244) target = $region32
        $region31: #{tpu_custom_call.1} parent=15 // pred_region
          %s247 = sadd.s32 %s21, %s22
          %s248 = smul.u32 4, %s247
          %p249 = scmp.lt.s32.totalorder %s248, 7
          %s250 = scalar_select %p249, %s248, 7
          %s251 = smul.addr %s250, 8
          %s252 = scalar_lea.vmem %s3, %s251
          %s253 = sadd.s32 %s21, %s22
          %s254 = smul.u32 4, %s253
        $region32: #{tpu_custom_call.1} parent=15 // pred_fallthru
          _
        // Predicated region
        $region33: #{tpu_custom_call.1} parent=15 // pred_check
          %p255 = pneg %p160
        $region34: #{tpu_custom_call.1} parent=15 // pred_check_branch
          %257 = sbr.rel (%p255) target = $region36
        $region35: #{tpu_custom_call.1} parent=15 // pred_region
          %s258 = sadd.s32 %s21, %s22
          %s259 = smul.u32 4, %s258
          %p260 = scmp.lt.s32.totalorder %s259, 7
          %s261 = scalar_select %p260, %s259, 7
          %s262 = smul.addr %s261, 8
          %s263 = scalar_lea.vmem %s4, %s262
          %s264 = sadd.s32 %s21, %s22
          %s265 = smul.u32 4, %s264
        $region36: #{tpu_custom_call.1} parent=15 // pred_fallthru
          _
      $region16: #{tpu_custom_call.1} parent=5 // pred_fallthru
        _
      %p266 = scmp.le.s32.totalorder 1, %s14
      %p267 = scmp.lt.s32.totalorder %s14, 3
      %p268 = pnand %p266, %p267
      %p269 = pneg %p268
      // Predicated region
      $region37: #{tpu_custom_call.1} parent=5 // pred_check
        _
      $region38: #{tpu_custom_call.1} parent=5 // pred_check_branch
        %271 = sbr.rel (%p268) target = $region40
      $region39: #{tpu_custom_call.1} parent=5 // pred_region
        %s272 = ssub.s32 %s14, 1
        %s273 = sadd.s32 %s23, %s24
        %s274 = smul.u32 4, %s273
        %p275 = scmp.lt.s32.totalorder %s274, 7
        %s276 = scalar_select %p275, %s274, 7
        %s277 = smul.addr %s276, 8
        %s278 = scalar_lea.vmem %s0, %s277
        %p279 = pneg %p54
        %p280 = pneg %p51
        %s281 = sadd.s32 %s23, %s24
        %s282 = smul.u32 4, %s281
        %p283 = scmp.lt.s32.totalorder %s282, 7
        %s284 = scalar_select %p283, %s282, 7
        %s285 = smul.addr %s284, 8
        %s286 = scalar_lea.vmem %s1, %s285
        %p287 = pneg %p82
        %p288 = pneg %p79
        %s289 = sadd.s32 %s23, %s24
        %s290 = smul.u32 4, %s289
        %p291 = scmp.lt.s32.totalorder %s290, 7
        %s292 = scalar_select %p291, %s290, 7
        %s293 = smul.addr %s292, 8
        %s294 = scalar_lea.vmem %s2, %s293
        %p295 = pneg %p110
        %p296 = pneg %p107
        %s297 = sadd.s32 %s23, %s24
        %s298 = smul.u32 4, %s297
        %p299 = scmp.lt.s32.totalorder %s298, 7
        %s300 = scalar_select %p299, %s298, 7
        %s301 = smul.addr %s300, 8
        %s302 = scalar_lea.vmem %s3, %s301
        %p303 = pneg %p138
        %p304 = pneg %p135
        %s305 = sadd.s32 %s23, %s24
        %s306 = smul.u32 4, %s305
        %p307 = scmp.lt.s32.totalorder %s306, 7
        %s308 = scalar_select %p307, %s306, 7
        %s309 = smul.addr %s308, 8
        %s310 = scalar_lea.vmem %s4, %s309
        %p311 = pneg %p166
        %p312 = pneg %p163
        %p313 = pneg %p192
        %p314 = pneg %p189
        %s315 = sand.u32 %s179, 1
        %s316 = scalar_lea.sflag [#allocation6], %s315
        %s317 = sand.u32 %s179, 1
        %s318 = smul.addr %s317, 8
        %s319 = scalar_lea.vmem [#allocation5], %s318
        %s320 = sadd.s32 %s23, %s24
        %s321 = smul.u32 4, %s320
        %p322 = scmp.lt.s32.totalorder %s321, 7
        %s323 = scalar_select %p322, %s321, 7
        %s324 = smul.addr %s323, 8
        %s325 = scalar_lea.vmem %s0, %s324
        %s326 = sadd.s32 %s23, %s24
        %s327 = smul.u32 4, %s326
        %s328 = sadd.s32 %s23, %s24
        %s329 = smul.u32 4, %s328
        %p330 = scmp.lt.s32.totalorder %s329, 7
        %s331 = scalar_select %p330, %s329, 7
        %s332 = smul.addr %s331, 8
        %s333 = scalar_lea.vmem %s1, %s332
        %s334 = sadd.s32 %s23, %s24
        %s335 = smul.u32 4, %s334
        %s336 = sadd.s32 %s23, %s24
        %s337 = smul.u32 4, %s336
        %p338 = scmp.lt.s32.totalorder %s337, 7
        %s339 = scalar_select %p338, %s337, 7
        %s340 = smul.addr %s339, 8
        %s341 = scalar_lea.vmem %s2, %s340
        %s342 = sadd.s32 %s23, %s24
        %s343 = smul.u32 4, %s342
        %s344 = sadd.s32 %s23, %s24
        %s345 = smul.u32 4, %s344
        %p346 = scmp.lt.s32.totalorder %s345, 7
        %s347 = scalar_select %p346, %s345, 7
        %s348 = smul.addr %s347, 8
        %s349 = scalar_lea.vmem %s3, %s348
        %s350 = sadd.s32 %s23, %s24
        %s351 = smul.u32 4, %s350
        %s352 = sadd.s32 %s23, %s24
        %s353 = smul.u32 4, %s352
        %p354 = scmp.lt.s32.totalorder %s353, 7
        %s355 = scalar_select %p354, %s353, 7
        %s356 = smul.addr %s355, 8
        %s357 = scalar_lea.vmem %s4, %s356
        %s358 = sadd.s32 %s23, %s24
        %s359 = smul.u32 4, %s358
        %p360 = scmp.eq.s32.totalorder %s24, 0
        // Predicated region
        $region41: #{tpu_custom_call.1} parent=39 // pred_check
          %p361 = pneg %p360
        $region42: #{tpu_custom_call.1} parent=39 // pred_check_branch
          %363 = sbr.rel (%p361) target = $region44
        $region43: #{tpu_custom_call.1} parent=39 // pred_region
          %vm364 = vcmask 7168
          %365 = vst.msk [vmem:[#allocation2] sm:$0xff] %vm364, 0.0
          %366 = vst.msk [vmem:[#allocation2 + $0x8] sm:$0xff] %vm364, 0.0
          %367 = vst.msk [vmem:[#allocation2 + $0x10] sm:$0xff] %vm364, 0.0
          %368 = vst.msk [vmem:[#allocation2 + $0x18] sm:$0xff] %vm364, 0.0
          %369 = vst.msk [vmem:[#allocation3] sm:$0xff] %vm364, 0.0
          %370 = vst.msk [vmem:[#allocation3 + $0x8] sm:$0xff] %vm364, 0.0
          %371 = vst.msk [vmem:[#allocation3 + $0x10] sm:$0xff] %vm364, 0.0
          %372 = vst.msk [vmem:[#allocation3 + $0x18] sm:$0xff] %vm364, 0.0
          %373 = vst.msk [vmem:[#allocation4] sm:$0xff] %vm364, 0.0
          %374 = vst.msk [vmem:[#allocation4 + $0x8] sm:$0xff] %vm364, 0.0
          %375 = vst.msk [vmem:[#allocation4 + $0x10] sm:$0xff] %vm364, 0.0
          %376 = vst.msk [vmem:[#allocation4 + $0x18] sm:$0xff] %vm364, 0.0
        $region44: #{tpu_custom_call.1} parent=39 // pred_fallthru
          _
        %v377 = vld [vmem:[%s349] sm:$0xff]
        %v378 = vld [vmem:[%s349 + $0x8] sm:$0xff]
        %v379 = vld [vmem:[%s349 + $0x10] sm:$0xff]
        %v380 = vld [vmem:[%s349 + $0x18] sm:$0xff]
        %v381 = vld [vmem:[%s357] sm:$0xff]
        %v382 = vld [vmem:[%s357 + $0x8] sm:$0xff]
        %v383 = vld [vmem:[%s357 + $0x10] sm:$0xff]
        %v384 = vld [vmem:[%s357 + $0x18] sm:$0xff]
        %v385 = vld [vmem:[%s333] sm:$0xff]
        %v386 = vld [vmem:[%s333 + $0x8] sm:$0xff]
        %v387 = vld [vmem:[%s333 + $0x10] sm:$0xff]
        %v388 = vld [vmem:[%s333 + $0x18] sm:$0xff]
        %v389 = vld [vmem:[%s341] sm:$0xff]
        %v390 = vld [vmem:[%s341 + $0x8] sm:$0xff]
        %v391 = vld [vmem:[%s341 + $0x10] sm:$0xff]
        %v392 = vld [vmem:[%s341 + $0x18] sm:$0xff]
        %v393 = vld [vmem:[%s325] sm:$0xff]
        %v394 = vld [vmem:[%s325 + $0x8] sm:$0xff]
        %v395 = vld [vmem:[%s325 + $0x10] sm:$0xff]
        %v396 = vld [vmem:[%s325 + $0x18] sm:$0xff]
        %vm397 = vcmp.eq.s32.totalorder %v393, 1
        %vm398 = vcmp.eq.s32.totalorder %v394, 1
        %vm399 = vcmp.eq.s32.totalorder %v395, 1
        %vm400 = vcmp.eq.s32.totalorder %v396, 1
        %v401 = vsel %vm397, 1, 0
        %v402 = vsel %vm398, 1, 0
        %v403 = vsel %vm399, 1, 0
        %v404 = vsel %vm400, 1, 0
        %v405 = vcvt.s32.f32 %v401
        %v406 = vcvt.s32.f32 %v402
        %v407 = vcvt.s32.f32 %v403
        %v408 = vcvt.s32.f32 %v404
        %v409 = vlaneseq
        %v410 = vand.u32 %v409, 127
        %v411 = vld [vmem:[#allocation2] sm:$0xff]
        %v412 = vld [vmem:[#allocation2 + $0x8] sm:$0xff]
        %v413 = vld [vmem:[#allocation2 + $0x10] sm:$0xff]
        %v414 = vld [vmem:[#allocation2 + $0x18] sm:$0xff]
        %vm415 = vcmask 64512
        %v416 = vsel %vm415, %v377, -inf
        %417 = vmax.xlane.f32.xlu0 %v416
        %v418 = vpop.xlane.xlu0 %417
        %v419 = vsel %vm415, %v378, -inf
        %420 = vmax.xlane.f32.xlu0 %v419
        %v421 = vpop.xlane.xlu0 %420
        %v422 = vsel %vm415, %v379, -inf
        %423 = vmax.xlane.f32.xlu0 %v422
        %v424 = vpop.xlane.xlu0 %423
        %v425 = vsel %vm415, %v380, -inf
        %426 = vmax.xlane.f32.xlu0 %v425
        %v427 = vpop.xlane.xlu0 %426
        %v428 = vsub.f32 %v377, %v418
        %v429 = vsub.f32 %v378, %v421
        %v430 = vsub.f32 %v379, %v424
        %v431 = vsub.f32 %v380, %v427
        %v432 = vmul.f32 %v428, 1.442695
        %v433 = vpow.pop %v432
        %v434 = vmul.f32 %v429, 1.442695
        %v435 = vpow.pop %v434
        %v436 = vmul.f32 %v430, 1.442695
        %v437 = vpow.pop %v436
        %v438 = vmul.f32 %v431, 1.442695
        %v439 = vpow.pop %v438
        %v440 = vsel %vm415, %v433, 0.0
        %441 = vadd.xlane.f32.xlu0 %v440
        %v442 = vpop.xlane.xlu0 %441
        %v443 = vsel %vm415, %v435, 0.0
        %444 = vadd.xlane.f32.xlu0 %v443
        %v445 = vpop.xlane.xlu0 %444
        %v446 = vsel %vm415, %v437, 0.0
        %447 = vadd.xlane.f32.xlu0 %v446
        %v448 = vpop.xlane.xlu0 %447
        %v449 = vsel %vm415, %v439, 0.0
        %450 = vadd.xlane.f32.xlu0 %v449
        %v451 = vpop.xlane.xlu0 %450
        %452 = vset.pattern.permute.xlu0 0
        %453 = vperm.xlu0 %452, %v385
        %v454 = vpop.permute.xlu0 %453
        %455 = vset.pattern.permute.xlu0 0
        %456 = vperm.xlu0 %455, %v386
        %v457 = vpop.permute.xlu0 %456
        %458 = vset.pattern.permute.xlu0 0
        %459 = vperm.xlu0 %458, %v387
        %v460 = vpop.permute.xlu0 %459
        %461 = vset.pattern.permute.xlu0 0
        %462 = vperm.xlu0 %461, %v388
        %v463 = vpop.permute.xlu0 %462
        %vm464 = vcmp.eq.s32.totalorder %v410, %v454
        %vm465 = vcmp.eq.s32.totalorder %v410, %v457
        %vm466 = vcmp.eq.s32.totalorder %v410, %v460
        %vm467 = vcmp.eq.s32.totalorder %v410, %v463
        %v468 = vsel %vm464, %v377, 0.0
        %v469 = vsel %vm465, %v378, 0.0
        %v470 = vsel %vm466, %v379, 0.0
        %v471 = vsel %vm467, %v380, 0.0
        %v472 = vsel %vm415, %v468, 0.0
        %473 = vadd.xlane.f32.xlu0 %v472
        %v474 = vpop.xlane.xlu0 %473
        %v475 = vsel %vm415, %v469, 0.0
        %476 = vadd.xlane.f32.xlu0 %v475
        %v477 = vpop.xlane.xlu0 %476
        %v478 = vsel %vm415, %v470, 0.0
        %479 = vadd.xlane.f32.xlu0 %v478
        %v480 = vpop.xlane.xlu0 %479
        %v481 = vsel %vm415, %v471, 0.0
        %482 = vadd.xlane.f32.xlu0 %v481
        %v483 = vpop.xlane.xlu0 %482
        %v484 = vlog2.pop %v442
        %v485 = vmul.f32 %v484, 0.6931472
        %v486 = vlog2.pop %v445
        %v487 = vmul.f32 %v486, 0.6931472
        %v488 = vlog2.pop %v448
        %v489 = vmul.f32 %v488, 0.6931472
        %v490 = vlog2.pop %v451
        %v491 = vmul.f32 %v490, 0.6931472
        %v492 = vadd.f32 %v418, %v485
        %v493 = vadd.f32 %v421, %v487
        %v494 = vadd.f32 %v424, %v489
        %v495 = vadd.f32 %v427, %v491
        %v496 = vsub.f32 %v492, %v474
        %v497 = vsub.f32 %v493, %v477
        %v498 = vsub.f32 %v494, %v480
        %v499 = vsub.f32 %v495, %v483
        %v500 = vmul.f32 %v496, %v405
        %v501 = vmul.f32 %v497, %v406
        %v502 = vmul.f32 %v498, %v407
        %v503 = vmul.f32 %v499, %v408
        %v504 = vadd.f32 %v411, %v500
        %v505 = vadd.f32 %v412, %v501
        %v506 = vadd.f32 %v413, %v502
        %v507 = vadd.f32 %v414, %v503
        %vm508 = vcmask 7168
        %509 = vst.msk [vmem:[#allocation2] sm:$0xff] %vm508, %v504
        %510 = vst.msk [vmem:[#allocation2 + $0x8] sm:$0xff] %vm508, %v505
        %511 = vst.msk [vmem:[#allocation2 + $0x10] sm:$0xff] %vm508, %v506
        %512 = vst.msk [vmem:[#allocation2 + $0x18] sm:$0xff] %vm508, %v507
        %v513 = vld [vmem:[#allocation3] sm:$0xff]
        %v514 = vld [vmem:[#allocation3 + $0x8] sm:$0xff]
        %v515 = vld [vmem:[#allocation3 + $0x10] sm:$0xff]
        %v516 = vld [vmem:[#allocation3 + $0x18] sm:$0xff]
        %v517 = vsel %vm415, %v381, -inf
        %518 = vmax.xlane.f32.xlu0 %v517
        %v519 = vpop.xlane.xlu0 %518
        %v520 = vsel %vm415, %v382, -inf
        %521 = vmax.xlane.f32.xlu0 %v520
        %v522 = vpop.xlane.xlu0 %521
        %v523 = vsel %vm415, %v383, -inf
        %524 = vmax.xlane.f32.xlu0 %v523
        %v525 = vpop.xlane.xlu0 %524
        %v526 = vsel %vm415, %v384, -inf
        %527 = vmax.xlane.f32.xlu0 %v526
        %v528 = vpop.xlane.xlu0 %527
        %v529 = vsub.f32 %v381, %v519
        %v530 = vsub.f32 %v382, %v522
        %v531 = vsub.f32 %v383, %v525
        %v532 = vsub.f32 %v384, %v528
        %v533 = vmul.f32 %v529, 1.442695
        %v534 = vpow.pop %v533
        %v535 = vmul.f32 %v530, 1.442695
        %v536 = vpow.pop %v535
        %v537 = vmul.f32 %v531, 1.442695
        %v538 = vpow.pop %v537
        %v539 = vmul.f32 %v532, 1.442695
        %v540 = vpow.pop %v539
        %v541 = vsel %vm415, %v534, 0.0
        %542 = vadd.xlane.f32.xlu0 %v541
        %v543 = vpop.xlane.xlu0 %542
        %v544 = vsel %vm415, %v536, 0.0
        %545 = vadd.xlane.f32.xlu0 %v544
        %v546 = vpop.xlane.xlu0 %545
        %v547 = vsel %vm415, %v538, 0.0
        %548 = vadd.xlane.f32.xlu0 %v547
        %v549 = vpop.xlane.xlu0 %548
        %v550 = vsel %vm415, %v540, 0.0
        %551 = vadd.xlane.f32.xlu0 %v550
        %v552 = vpop.xlane.xlu0 %551
        %553 = vset.pattern.permute.xlu0 0
        %554 = vperm.xlu0 %553, %v389
        %v555 = vpop.permute.xlu0 %554
        %556 = vset.pattern.permute.xlu0 0
        %557 = vperm.xlu0 %556, %v390
        %v558 = vpop.permute.xlu0 %557
        %559 = vset.pattern.permute.xlu0 0
        %560 = vperm.xlu0 %559, %v391
        %v561 = vpop.permute.xlu0 %560
        %562 = vset.pattern.permute.xlu0 0
        %563 = vperm.xlu0 %562, %v392
        %v564 = vpop.permute.xlu0 %563
        %vm565 = vcmp.eq.s32.totalorder %v410, %v555
        %vm566 = vcmp.eq.s32.totalorder %v410, %v558
        %vm567 = vcmp.eq.s32.totalorder %v410, %v561
        %vm568 = vcmp.eq.s32.totalorder %v410, %v564
        %v569 = vsel %vm565, %v381, 0.0
        %v570 = vsel %vm566, %v382, 0.0
        %v571 = vsel %vm567, %v383, 0.0
        %v572 = vsel %vm568, %v384, 0.0
        %v573 = vsel %vm415, %v569, 0.0
        %574 = vadd.xlane.f32.xlu0 %v573
        %v575 = vpop.xlane.xlu0 %574
        %v576 = vsel %vm415, %v570, 0.0
        %577 = vadd.xlane.f32.xlu0 %v576
        %v578 = vpop.xlane.xlu0 %577
        %v579 = vsel %vm415, %v571, 0.0
        %580 = vadd.xlane.f32.xlu0 %v579
        %v581 = vpop.xlane.xlu0 %580
        %v582 = vsel %vm415, %v572, 0.0
        %583 = vadd.xlane.f32.xlu0 %v582
        %v584 = vpop.xlane.xlu0 %583
        %v585 = vlog2.pop %v543
        %v586 = vmul.f32 %v585, 0.6931472
        %v587 = vlog2.pop %v546
        %v588 = vmul.f32 %v587, 0.6931472
        %v589 = vlog2.pop %v549
        %v590 = vmul.f32 %v589, 0.6931472
        %v591 = vlog2.pop %v552
        %v592 = vmul.f32 %v591, 0.6931472
        %v593 = vadd.f32 %v519, %v586
        %v594 = vadd.f32 %v522, %v588
        %v595 = vadd.f32 %v525, %v590
        %v596 = vadd.f32 %v528, %v592
        %v597 = vsub.f32 %v593, %v575
        %v598 = vsub.f32 %v594, %v578
        %v599 = vsub.f32 %v595, %v581
        %v600 = vsub.f32 %v596, %v584
        %v601 = vmul.f32 %v597, %v405
        %v602 = vmul.f32 %v598, %v406
        %v603 = vmul.f32 %v599, %v407
        %v604 = vmul.f32 %v600, %v408
        %v605 = vadd.f32 %v513, %v601
        %v606 = vadd.f32 %v514, %v602
        %v607 = vadd.f32 %v515, %v603
        %v608 = vadd.f32 %v516, %v604
        %609 = vst.msk [vmem:[#allocation3] sm:$0xff] %vm508, %v605
        %610 = vst.msk [vmem:[#allocation3 + $0x8] sm:$0xff] %vm508, %v606
        %611 = vst.msk [vmem:[#allocation3 + $0x10] sm:$0xff] %vm508, %v607
        %612 = vst.msk [vmem:[#allocation3 + $0x18] sm:$0xff] %vm508, %v608
        %v613 = vld [vmem:[#allocation4] sm:$0xff]
        %v614 = vld [vmem:[#allocation4 + $0x8] sm:$0xff]
        %v615 = vld [vmem:[#allocation4 + $0x10] sm:$0xff]
        %v616 = vld [vmem:[#allocation4 + $0x18] sm:$0xff]
        %v617 = vadd.f32 %v613, %v405
        %v618 = vadd.f32 %v614, %v406
        %v619 = vadd.f32 %v615, %v407
        %v620 = vadd.f32 %v616, %v408
        %621 = vst.msk [vmem:[#allocation4] sm:$0xff] %vm508, %v617
        %622 = vst.msk [vmem:[#allocation4 + $0x8] sm:$0xff] %vm508, %v618
        %623 = vst.msk [vmem:[#allocation4 + $0x10] sm:$0xff] %vm508, %v619
        %624 = vst.msk [vmem:[#allocation4 + $0x18] sm:$0xff] %vm508, %v620
        // Predicated region
        $region45: #{tpu_custom_call.1} parent=39 // pred_check
          %p625 = pneg %p360
        $region46: #{tpu_custom_call.1} parent=39 // pred_check_branch
          %627 = sbr.rel (%p625) target = $region48
        $region47: #{tpu_custom_call.1} parent=39 // pred_region
          %v628 = vld [vmem:[#allocation2] sm:$0xff]
          %v629 = vld [vmem:[#allocation2 + $0x8] sm:$0xff]
          %v630 = vld [vmem:[#allocation2 + $0x10] sm:$0xff]
          %v631 = vld [vmem:[#allocation2 + $0x18] sm:$0xff]
          %v632 = vsel %vm508, %v628, 0.0
          %v633 = vsel %vm508, %v629, 0.0
          %v634 = vadd.f32 %v632, %v633
          %v635 = vsel %vm508, %v630, 0.0
          %v636 = vadd.f32 %v634, %v635
          %v637 = vsel %vm508, %v631, 0.0
          %v638 = vadd.f32 %v636, %v637
          %639 = vadd.xlane.f32.xlu0 %v638
          %v640 = vpop.xlane.xlu0 %639
          %v641 = vrot.slane %v640, 4
          %v642 = vadd.f32 %v640, %v641
          %v643 = vrot.slane %v642, 2
          %v644 = vadd.f32 %v642, %v643
          %v645 = vrot.slane %v644, 1
          %v646 = vadd.f32 %v644, %v645
          %s647 = vtos %v646
          %v648 = vld [vmem:[#allocation3] sm:$0xff]
          %v649 = vld [vmem:[#allocation3 + $0x8] sm:$0xff]
          %v650 = vld [vmem:[#allocation3 + $0x10] sm:$0xff]
          %v651 = vld [vmem:[#allocation3 + $0x18] sm:$0xff]
          %v652 = vsel %vm508, %v648, 0.0
          %v653 = vsel %vm508, %v649, 0.0
          %v654 = vadd.f32 %v652, %v653
          %v655 = vsel %vm508, %v650, 0.0
          %v656 = vadd.f32 %v654, %v655
          %v657 = vsel %vm508, %v651, 0.0
          %v658 = vadd.f32 %v656, %v657
          %659 = vadd.xlane.f32.xlu0 %v658
          %v660 = vpop.xlane.xlu0 %659
          %v661 = vrot.slane %v660, 4
          %v662 = vadd.f32 %v660, %v661
          %v663 = vrot.slane %v662, 2
          %v664 = vadd.f32 %v662, %v663
          %v665 = vrot.slane %v664, 1
          %v666 = vadd.f32 %v664, %v665
          %s667 = vtos %v666
          %v668 = vld [vmem:[#allocation4] sm:$0xff]
          %v669 = vld [vmem:[#allocation4 + $0x8] sm:$0xff]
          %v670 = vld [vmem:[#allocation4 + $0x10] sm:$0xff]
          %v671 = vld [vmem:[#allocation4 + $0x18] sm:$0xff]
          %v672 = vsel %vm508, %v668, 0.0
          %v673 = vsel %vm508, %v669, 0.0
          %v674 = vadd.f32 %v672, %v673
          %v675 = vsel %vm508, %v670, 0.0
          %v676 = vadd.f32 %v674, %v675
          %v677 = vsel %vm508, %v671, 0.0
          %v678 = vadd.f32 %v676, %v677
          %679 = vadd.xlane.f32.xlu0 %v678
          %v680 = vpop.xlane.xlu0 %679
          %v681 = vrot.slane %v680, 4
          %v682 = vadd.f32 %v680, %v681
          %v683 = vrot.slane %v682, 2
          %v684 = vadd.f32 %v682, %v683
          %v685 = vrot.slane %v684, 1
          %v686 = vadd.f32 %v684, %v685
          %s687 = vtos %v686
          %v688 = vlaneseq
          %v689 = vshrl.u32 %v688, 7
          %vm690 = vcmp.eq.s32.totalorder %v689, 0
          %vm691 = vcmp.eq.s32.totalorder %v410, 0
          %vm692 = vmand %vm690, %vm691
          %vm693 = vcmp.eq.s32.totalorder %v410, 1
          %vm694 = vmand %vm690, %vm693
          %vm695 = vcmp.eq.s32.totalorder %v410, 2
          %vm696 = vmand %vm690, %vm695
          %v697 = vstv %s687
          %v698 = vsel %vm696, %v697, 0.0
          %v699 = vstv %s667
          %v700 = vsel %vm694, %v699, %v698
          %v701 = vstv %s647
          %v702 = vsel %vm692, %v701, %v700
          %703 = vst [vmem:[%s319] sm:$0xff] %v702
        $region48: #{tpu_custom_call.1} parent=39 // pred_fallthru
          _
        %s704 = sand.u32 %s179, 1
        %s705 = scalar_lea.sflag [#allocation6], %s704
        %s706 = sand.u32 %s179, 1
        %s707 = smul.addr %s706, 8
        %s708 = scalar_lea.vmem [#allocation5], %s707
        // Predicated region
        $region49: #{tpu_custom_call.1} parent=39 // pred_check
          %p709 = pneg %p189
        $region50: #{tpu_custom_call.1} parent=39 // pred_check_branch
          %711 = sbr.rel (%p709) target = $region52
        $region51: #{tpu_custom_call.1} parent=39 // pred_region
          %s713 = ssub.s32 128, 128
          %714 = vsyncadd %s705, %s713
          %s715 = smul.addr %s23, 128
          %s716 = scalar_lea.hbm %s5, %s715
          %s718 = sshll.u32 %s708, 4
          %s719 = int_to_ptr.vmem [resolvable:$true] %s718
          %721 = dma.vmem_to_hbm [thread:$0]  %s719, 128, %s716, %s705
        $region52: #{tpu_custom_call.1} parent=39 // pred_fallthru
          _
      $region40: #{tpu_custom_call.1} parent=5 // pred_fallthru
        _
      %p722 = scmp.le.s32.totalorder 2, %s14
      // Predicated region
      $region53: #{tpu_custom_call.1} parent=5 // pred_check
        %p723 = pneg %p722
      $region54: #{tpu_custom_call.1} parent=5 // pred_check_branch
        %725 = sbr.rel (%p723) target = $region56
      $region55: #{tpu_custom_call.1} parent=5 // pred_region
        %s726 = ssub.s32 %s14, 2
        // Predicated region
        $region57: #{tpu_custom_call.1} parent=55 // pred_check
          %p727 = pneg %p195
        $region58: #{tpu_custom_call.1} parent=55 // pred_check_branch
          %729 = sbr.rel (%p727) target = $region60
        $region59: #{tpu_custom_call.1} parent=55 // pred_region
          %s730 = sand.u32 %s180, 1
          %s731 = scalar_lea.sflag [#allocation6], %s730
          %s732 = sand.u32 %s180, 1
          %s733 = smul.addr %s732, 8
          %s734 = scalar_lea.vmem [#allocation5], %s733
          %735 = dma.done %s731, 128
        $region60: #{tpu_custom_call.1} parent=55 // pred_fallthru
          _
      $region56: #{tpu_custom_call.1} parent=5 // pred_fallthru
        _
    $region6: #{tpu_custom_call.1} parent=1 // loop_footer
      %s18 = sadd.s32 1, %s14
    $region7: #{tpu_custom_call.1} parent=1 // loop_footer_branch
      %13 = sbr.rel target = $region3
    $region8: #{tpu_custom_call.1} parent=1 // loop_exit
      _
    %736 = vsyncpa [#allocation6], 1
    %s737 = scalar_lea.sflag [#allocation6], 1
    %738 = vsyncpa %s737, 1

</llo_original>
